<compile_context>
chip_gen: v7x
topology: tpu7x:2x2x1
jax: 0.10.0
libtpu: 0.0.40
codegen_flags: <defaults>
</compile_context>

<pallas_src>
import functools

import jax
import jax.numpy as jnp
from jax import lax
from jax.experimental import pallas as pl
from jax.experimental.pallas import tpu as pltpu


def _round_up(x, m):
    return (x + m - 1) // m * m


def _bf16_activations_ok():
    """bf16 VPU/EUP only on v6e / v7x; keep f32 activations elsewhere."""
    try:
        kind = jax.devices()[0].device_kind.lower()
    except Exception:
        return False
    return ("v6" in kind) or ("v7" in kind) or ("7x" in kind)


# ---------------------------------------------------------------------------
# Pallas kernel: whole 4-layer MLP, batch on the lane axis
# ---------------------------------------------------------------------------
def _reward_mlp_kernel(x_ref,
                       w1t_ref, b1_ref,
                       w2t_ref, b2_ref,
                       w3t_ref, b3_ref,
                       w4_ref, b4_ref,
                       o_ref, *, compute_dtype, act_dtype):
    # x tile arrives in its natural (tb, D_in) layout; cast in-kernel.
    x = x_ref[...].astype(compute_dtype)                         # (tb, D_in)

    # Layer 1: contract D_in of both operands -> (H1, tb); batch -> lanes.
    h = lax.dot_general(w1t_ref[...], x,
                        dimension_numbers=(((1,), (1,)), ((), ())),
                        preferred_element_type=jnp.float32)      # (H1, tb) f32
    h = jnp.tanh(h.astype(act_dtype) + b1_ref[...])              # tanh on EUP

    # Layer 2.
    h = jnp.dot(w2t_ref[...], h.astype(compute_dtype),
                preferred_element_type=jnp.float32)
    h = jnp.tanh(h.astype(act_dtype) + b2_ref[...])

    # Layer 3.
    h = jnp.dot(w3t_ref[...], h.astype(compute_dtype),
                preferred_element_type=jnp.float32)
    h = jnp.tanh(h.astype(act_dtype) + b3_ref[...])              # (H3, tb)

    # Layer 4 (out_features == 1): VPU multiply + sublane reduce instead of a
    # nearly-empty MXU pass; f32 reduce + bias.
    out = jnp.sum(h.astype(jnp.float32) * w4_ref[...],
                  axis=0, keepdims=True) + b4_ref[...]           # (1, tb)

    o_ref[...] = jnp.clip(out, -10.0, 10.0).astype(o_ref.dtype)


# ---------------------------------------------------------------------------
# Wrapper
# ---------------------------------------------------------------------------
def reward_predictor_forward(state_action, params, *, batch_tile=None,
                             compute_dtype=jnp.bfloat16,
                             activation_dtype=None,
                             return_row=False):
    """Pallas forward pass for RewardPredictor.

    state_action: (B, D_in) float32.
    params: [(w1,b1),(w2,b2),(w3,b3),(w4,b4)], w_i shaped (in, out).
    compute_dtype: matmul-operand dtype (bfloat16 default; MXU-native on all
      current TPUs). Accumulation, final layer and clamp stay f32.
    activation_dtype: dtype of bias-add/tanh; None -> bf16 on v6e/v7x when
      compute_dtype is bf16, else f32 (v5e has no bf16 VPU/EUP).
    return_row: if True, return the lane-dense (1, B) row (skips the
      (1,Bp)->(B,1) relayout; useful for latency-sensitive tiny batches).
    Returns (B, 1) float32 (or (1, B) if return_row), clamped to [-10, 10].
    """
    (w1, b1), (w2, b2), (w3, b3), (w4, b4) = params
    B, D_in = state_action.shape
    H1, H2, H3 = w1.shape[1], w2.shape[1], w3.shape[1]
    D_out = w4.shape[1]
    assert D_out == 1

    compute_dtype = jnp.dtype(compute_dtype)
    if activation_dtype is None:
        if compute_dtype == jnp.dtype(jnp.bfloat16) and _bf16_activations_ok():
            activation_dtype = jnp.bfloat16
        else:
            activation_dtype = jnp.float32
    activation_dtype = jnp.dtype(activation_dtype)

    # ---- batch tiling: batch lives on the lane axis -> multiples of 128 ----
    if batch_tile is None:
        # Large cap (step overhead ~0.35us vs ~1us compute per 1024 lanes),
        # but >= 2 grid steps whenever B > 128 (pipelining + v7x megacore).
        batch_tile = max(128, min(8192, _round_up(max(B // 2, 1), 128)))
    else:
        batch_tile = max(128, _round_up(batch_tile, 128))

    # VMEM sizing: x double-buffered + ~4 live (H, tile) f32 temporaries.
    def vmem_est(tile):
        x_bytes = 2 * tile * D_in * 4
        h_bytes = 4 * max(H1, H2, H3) * tile * 4
        out_bytes = 2 * tile * 4
        w_bytes = 4 * (H1 * D_in + H2 * H1 + H3 * H2 + H3 + H1 + H2 + H3 + 2)
        return x_bytes + h_bytes + out_bytes + w_bytes + (1 << 20)

    VMEM_BUDGET = 24 << 20           # safe on v5e/v6e/v7x (v7x: 64 MiB phys)
    while vmem_est(batch_tile) > VMEM_BUDGET and batch_tile > 128:
        batch_tile = max(128, _round_up(batch_tile // 2, 128))

    Bp = _round_up(B, batch_tile)
    grid = (Bp // batch_tile,)

    # ---- layout plumbing (no activation transpose: x stays (B, D_in)) ------
    x = state_action.astype(jnp.float32)
    if Bp != B:
        x = jnp.pad(x, ((0, Bp - B), (0, 0)))
    # TODO(synk): for the RL tiny-batch use case, concatenate ensemble members
    # / preference pairs / env steps along the batch axis before calling this
    # wrapper so v7x gets >= 2 grid steps (both TensorCores busy).

    w1t = w1.T.astype(compute_dtype)                     # (H1, D_in)
    w2t = w2.T.astype(compute_dtype)                     # (H2, H1)
    w3t = w3.T.astype(compute_dtype)                     # (H3, H2)
    w4c = w4.astype(jnp.float32)                         # (H3, 1), VPU path
    b1c = b1.reshape(H1, 1).astype(activation_dtype)
    b2c = b2.reshape(H2, 1).astype(activation_dtype)
    b3c = b3.reshape(H3, 1).astype(activation_dtype)
    b4c = b4.reshape(1, 1).astype(jnp.float32)

    full = lambda shape: pl.BlockSpec(shape, lambda i: (0, 0))
    wbytes = compute_dtype.itemsize
    cost = pl.CostEstimate(
        flops=2 * Bp * (D_in * H1 + H1 * H2 + H2 * H3 + H3 * D_out),
        transcendentals=Bp * (H1 + H2 + H3),
        bytes_accessed=(Bp * D_in * 4 + Bp * 4
                        + (H1 * D_in + H2 * H1 + H3 * H2) * wbytes
                        + (H1 + H2 + H3) * activation_dtype.itemsize
                        + (H3 + 1) * 4),
    )

    vmem_needed = vmem_est(batch_tile)
    compiler_params = pltpu.CompilerParams(
        dimension_semantics=("parallel",),
        vmem_limit_bytes=(min(64 << 20, 2 * vmem_needed)
                          if vmem_needed > (12 << 20) else None),
    )

    out_row = pl.pallas_call(
        functools.partial(_reward_mlp_kernel,
                          compute_dtype=compute_dtype, act_dtype=activation_dtype),
        out_shape=jax.ShapeDtypeStruct((1, Bp), jnp.float32),
        grid_spec=pltpu.PrefetchScalarGridSpec(
            num_scalar_prefetch=0,
            grid=grid,
            in_specs=[
                pl.BlockSpec((batch_tile, D_in), lambda i: (i, 0)),   # x tile
                full((H1, D_in)), full((H1, 1)),
                full((H2, H1)), full((H2, 1)),
                full((H3, H2)), full((H3, 1)),
                full((H3, 1)), full((1, 1)),
            ],
            out_specs=pl.BlockSpec((1, batch_tile), lambda i: (0, i)),
        ),
        compiler_params=compiler_params,
        cost_estimate=cost,
    )(x, w1t, b1c, w2t, b2c, w3t, b3c, w4c, b4c)

    if return_row:
        return out_row[:, :B]                            # lane-dense (1, B)
    # (1, Bp) lane-dense row -> (B, 1) column (matches torch output shape).
    return out_row.reshape(Bp, 1)[:B]


# ---------------------------------------------------------------------------
# Deterministic parameter init (matches nn.Linear + xavier_uniform_, bias=0)
# ---------------------------------------------------------------------------
def xavier_uniform(key, fan_in, fan_out):
    bound = jnp.sqrt(6.0 / (fan_in + fan_out))
    # Stored as (fan_in, fan_out) so forward is x @ W (== x @ weight.T in torch).
    return jax.random.uniform(key, (fan_in, fan_out), jnp.float32,
                              minval=-bound, maxval=bound)


def init_reward_predictor_params(key, input_size, layer_sizes=(64, 64, 64),
                                 output_size=1):
    sizes = [input_size] + list(layer_sizes) + [output_size]
    params = []
    for i in range(len(sizes) - 1):
        key, sub = jax.random.split(key)
        w = xavier_uniform(sub, sizes[i], sizes[i + 1])
        b = jnp.zeros((sizes[i + 1],), jnp.float32)
        params.append((w, b))
    return params


# Pure-JAX reference for sanity checking.
def _reference_forward(x, params):
    (w1, b1), (w2, b2), (w3, b3), (w4, b4) = params
    h = jnp.tanh(x @ w1 + b1)
    h = jnp.tanh(h @ w2 + b2)
    h = jnp.tanh(h @ w3 + b3)
    out = h @ w4 + b4
    return jnp.clip(out, -10.0, 10.0)


if __name__ == "__main__":
    key = jax.random.PRNGKey(0)

    # Small env-like shapes: obs space (16,), action space (4,) -> input 20.
    obs_dim, act_dim = 16, 4
    input_size = obs_dim + act_dim

    key, k_params, k_x1, k_x2 = jax.random.split(key, 4)
    params = init_reward_predictor_params(k_params, input_size)

    # Case 1: tiny RL-style batch, f32 compute (tight check, single 128 tile).
    batch = 8
    x_small = jax.random.normal(k_x1, (batch, input_size), jnp.float32)
    out = jax.block_until_ready(
        reward_predictor_forward(x_small, params, compute_dtype=jnp.float32))
    ref = _reference_forward(x_small, params)
    assert out.shape == (batch, 1)
    assert jnp.allclose(out, ref, atol=1e-3, rtol=1e-3), (out, ref)

    # Case 2: larger, non-multiple batch, default bf16 path (loose check).
    batch2 = 300
    x_big = jax.random.normal(k_x2, (batch2, input_size), jnp.float32)
    ref2 = _reference_forward(x_big, params)
    out2 = jax.block_until_ready(reward_predictor_forward(x_big, params))
    assert out2.shape == (batch2, 1)
    assert float(jnp.max(jnp.abs(out2 - ref2))) < 0.1

    # Case 3: f32 compute on the multi-tile grid (tight check), plus row output.
    out3 = jax.block_until_ready(
        reward_predictor_forward(x_big, params, compute_dtype=jnp.float32,
                                 batch_tile=128))
    assert out3.shape == (batch2, 1)
    assert jnp.allclose(out3, ref2, atol=1e-3, rtol=1e-3)
    row = jax.block_until_ready(
        reward_predictor_forward(x_big, params, compute_dtype=jnp.float32,
                                 return_row=True))
    assert row.shape == (1, batch2)
    assert jnp.allclose(row.reshape(batch2, 1), ref2, atol=1e-3, rtol=1e-3)

    print("KERNEL_OK")
</pallas_src>

<mosaic_0001>
module attributes {stable_mosaic.version = 11 : i64} {
  func.func @_reward_mlp_kernel(%arg0: i32, %arg1: memref<128x20xf32, #tpu.memory_space<vmem>>, %arg2: memref<64x20xf32, #tpu.memory_space<vmem>>, %arg3: memref<64x1xf32, #tpu.memory_space<vmem>>, %arg4: memref<64x64xf32, #tpu.memory_space<vmem>>, %arg5: memref<64x1xf32, #tpu.memory_space<vmem>>, %arg6: memref<64x64xf32, #tpu.memory_space<vmem>>, %arg7: memref<64x1xf32, #tpu.memory_space<vmem>>, %arg8: memref<64x1xf32, #tpu.memory_space<vmem>>, %arg9: memref<1x1xf32, #tpu.memory_space<vmem>>, %arg10: memref<1x128xf32, #tpu.memory_space<vmem>>) attributes {dimension_semantics = [#tpu.dimension_semantics<parallel>], iteration_bounds = array<i64: 1>, scalar_prefetch = 0 : i64, scratch_operands = 0 : i64, tpu.core_type = #tpu.core_type<tc>, window_params = [{transform_indices = @transform_0, window_bounds = array<i64: 128, 20>}, {pipeline_mode = #tpu.pipeline_mode<synchronous>, transform_indices = @transform_1, window_bounds = array<i64: 64, 20>}, {pipeline_mode = #tpu.pipeline_mode<synchronous>, transform_indices = @transform_2, window_bounds = array<i64: 64, 1>}, {pipeline_mode = #tpu.pipeline_mode<synchronous>, transform_indices = @transform_3, window_bounds = array<i64: 64, 64>}, {pipeline_mode = #tpu.pipeline_mode<synchronous>, transform_indices = @transform_4, window_bounds = array<i64: 64, 1>}, {pipeline_mode = #tpu.pipeline_mode<synchronous>, transform_indices = @transform_5, window_bounds = array<i64: 64, 64>}, {pipeline_mode = #tpu.pipeline_mode<synchronous>, transform_indices = @transform_6, window_bounds = array<i64: 64, 1>}, {pipeline_mode = #tpu.pipeline_mode<synchronous>, transform_indices = @transform_7, window_bounds = array<i64: 64, 1>}, {pipeline_mode = #tpu.pipeline_mode<synchronous>, transform_indices = @transform_8, window_bounds = array<i64: 1, 1>}, {transform_indices = @transform_9, window_bounds = array<i64: 1, 128>}]} {
    %c0 = arith.constant 0 : index
    %c0_0 = arith.constant 0 : index
    %0 = vector.load %arg1[%c0, %c0_0] : memref<128x20xf32, #tpu.memory_space<vmem>>, vector<128x20xf32>
    %c0_1 = arith.constant 0 : index
    %c0_2 = arith.constant 0 : index
    %1 = vector.load %arg2[%c0_1, %c0_2] : memref<64x20xf32, #tpu.memory_space<vmem>>, vector<64x20xf32>
    %cst = arith.constant dense<0.000000e+00> : vector<64x128xf32>
    %2 = tpu.matmul %1, %0, %cst {dimension_numbers = #tpu.dot_dimension_numbers<[1], [1], [0], [0], [0, 0, 1, 0], [], []>} : vector<64x20xf32>, vector<128x20xf32>, vector<64x128xf32> -> vector<64x128xf32>
    %c0_3 = arith.constant 0 : index
    %c0_4 = arith.constant 0 : index
    %3 = vector.load %arg3[%c0_3, %c0_4] : memref<64x1xf32, #tpu.memory_space<vmem>>, vector<64x1xf32>
    %4 = vector.broadcast %3 : vector<64x1xf32> to vector<64x128xf32>
    %5 = arith.addf %2, %4 : vector<64x128xf32>
    %6 = math.tanh %5 : vector<64x128xf32>
    %c0_5 = arith.constant 0 : index
    %c0_6 = arith.constant 0 : index
    %7 = vector.load %arg4[%c0_5, %c0_6] : memref<64x64xf32, #tpu.memory_space<vmem>>, vector<64x64xf32>
    %cst_7 = arith.constant dense<0.000000e+00> : vector<64x128xf32>
    %8 = tpu.matmul %7, %6, %cst_7 {dimension_numbers = #tpu.dot_dimension_numbers<[1], [0], [0], [1], [0, 0, 1, 1], [], []>} : vector<64x64xf32>, vector<64x128xf32>, vector<64x128xf32> -> vector<64x128xf32>
    %c0_8 = arith.constant 0 : index
    %c0_9 = arith.constant 0 : index
    %9 = vector.load %arg5[%c0_8, %c0_9] : memref<64x1xf32, #tpu.memory_space<vmem>>, vector<64x1xf32>
    %10 = vector.broadcast %9 : vector<64x1xf32> to vector<64x128xf32>
    %11 = arith.addf %8, %10 : vector<64x128xf32>
    %12 = math.tanh %11 : vector<64x128xf32>
    %c0_10 = arith.constant 0 : index
    %c0_11 = arith.constant 0 : index
    %13 = vector.load %arg6[%c0_10, %c0_11] : memref<64x64xf32, #tpu.memory_space<vmem>>, vector<64x64xf32>
    %cst_12 = arith.constant dense<0.000000e+00> : vector<64x128xf32>
    %14 = tpu.matmul %13, %12, %cst_12 {dimension_numbers = #tpu.dot_dimension_numbers<[1], [0], [0], [1], [0, 0, 1, 1], [], []>} : vector<64x64xf32>, vector<64x128xf32>, vector<64x128xf32> -> vector<64x128xf32>
    %c0_13 = arith.constant 0 : index
    %c0_14 = arith.constant 0 : index
    %15 = vector.load %arg7[%c0_13, %c0_14] : memref<64x1xf32, #tpu.memory_space<vmem>>, vector<64x1xf32>
    %16 = vector.broadcast %15 : vector<64x1xf32> to vector<64x128xf32>
    %17 = arith.addf %14, %16 : vector<64x128xf32>
    %18 = math.tanh %17 : vector<64x128xf32>
    %c0_15 = arith.constant 0 : index
    %c0_16 = arith.constant 0 : index
    %19 = vector.load %arg8[%c0_15, %c0_16] : memref<64x1xf32, #tpu.memory_space<vmem>>, vector<64x1xf32>
    %20 = vector.broadcast %19 : vector<64x1xf32> to vector<64x128xf32>
    %21 = arith.mulf %18, %20 : vector<64x128xf32>
    %cst_17 = arith.constant dense<0.000000e+00> : vector<128xf32>
    %22 = vector.multi_reduction <add>, %21, %cst_17 [0] : vector<64x128xf32> to vector<128xf32>
    %23 = vector.shape_cast %22 : vector<128xf32> to vector<1x128xf32>
    %c0_18 = arith.constant 0 : index
    %c0_19 = arith.constant 0 : index
    %24 = vector.load %arg9[%c0_18, %c0_19] : memref<1x1xf32, #tpu.memory_space<vmem>>, vector<1x1xf32>
    %25 = vector.broadcast %24 : vector<1x1xf32> to vector<1x128xf32>
    %26 = arith.addf %23, %25 : vector<1x128xf32>
    %cst_20 = arith.constant -1.000000e+01 : f32
    %cst_21 = arith.constant 1.000000e+01 : f32
    %27 = vector.broadcast %cst_20 : f32 to vector<1x128xf32>
    %28 = arith.maximumf %27, %26 : vector<1x128xf32>
    %29 = vector.broadcast %cst_21 : f32 to vector<1x128xf32>
    %30 = arith.minimumf %29, %28 : vector<1x128xf32>
    %c0_22 = arith.constant 0 : index
    %c0_23 = arith.constant 0 : index
    %31 = vector.load %arg10[%c0_22, %c0_23] : memref<1x128xf32, #tpu.memory_space<vmem>>, vector<1x128xf32>
    tpu.vector_store %arg10[%c0_22, %c0_23], %30 {strides = array<i32>} : memref<1x128xf32, #tpu.memory_space<vmem>>, vector<1x128xf32>,
    return
  }
  func.func @transform_0(%arg0: i32) -> (i32, i32) {
    %c0_i32 = arith.constant 0 : i32
    %c0_i32_0 = arith.constant 0 : i32
    return %arg0, %c0_i32 : i32, i32
  }
  func.func @transform_1(%arg0: i32) -> (i32, i32) {
    %c0_i32 = arith.constant 0 : i32
    %c0_i32_0 = arith.constant 0 : i32
    %c0_i32_1 = arith.constant 0 : i32
    return %c0_i32, %c0_i32_0 : i32, i32
  }
  func.func @transform_2(%arg0: i32) -> (i32, i32) {
    %c0_i32 = arith.constant 0 : i32
    %c0_i32_0 = arith.constant 0 : i32
    %c0_i32_1 = arith.constant 0 : i32
    return %c0_i32, %c0_i32_0 : i32, i32
  }
  func.func @transform_3(%arg0: i32) -> (i32, i32) {
    %c0_i32 = arith.constant 0 : i32
    %c0_i32_0 = arith.constant 0 : i32
    %c0_i32_1 = arith.constant 0 : i32
    return %c0_i32, %c0_i32_0 : i32, i32
  }
  func.func @transform_4(%arg0: i32) -> (i32, i32) {
    %c0_i32 = arith.constant 0 : i32
    %c0_i32_0 = arith.constant 0 : i32
    %c0_i32_1 = arith.constant 0 : i32
    return %c0_i32, %c0_i32_0 : i32, i32
  }
  func.func @transform_5(%arg0: i32) -> (i32, i32) {
    %c0_i32 = arith.constant 0 : i32
    %c0_i32_0 = arith.constant 0 : i32
    %c0_i32_1 = arith.constant 0 : i32
    return %c0_i32, %c0_i32_0 : i32, i32
  }
  func.func @transform_6(%arg0: i32) -> (i32, i32) {
    %c0_i32 = arith.constant 0 : i32
    %c0_i32_0 = arith.constant 0 : i32
    %c0_i32_1 = arith.constant 0 : i32
    return %c0_i32, %c0_i32_0 : i32, i32
  }
  func.func @transform_7(%arg0: i32) -> (i32, i32) {
    %c0_i32 = arith.constant 0 : i32
    %c0_i32_0 = arith.constant 0 : i32
    %c0_i32_1 = arith.constant 0 : i32
    return %c0_i32, %c0_i32_0 : i32, i32
  }
  func.func @transform_8(%arg0: i32) -> (i32, i32) {
    %c0_i32 = arith.constant 0 : i32
    %c0_i32_0 = arith.constant 0 : i32
    %c0_i32_1 = arith.constant 0 : i32
    return %c0_i32, %c0_i32_0 : i32, i32
  }
  func.func @transform_9(%arg0: i32) -> (i32, i32) {
    %c0_i32 = arith.constant 0 : i32
    %c0_i32_0 = arith.constant 0 : i32
    return %c0_i32, %arg0 : i32, i32
  }
}

</mosaic_0001>

<llo_original>
// kernel: tpu_custom_call.1
$region0: #{tpu_custom_call.1}
  #allocation0 [shape = 'u32[]', space=smem, size = 0x4, offset = 0x4, fixed_abs, tag = 'smem constant byte address 0x4 - core index']
  #allocation1 [shape = 'u32[144,128]{1,0:T(1,128)}', space=vmem, size = 0x12000, scoped, tag = 'internal scratch']
  #allocation2 [shape = 'f32[1,1]{1,0:T(1,128)S(1)}', space=vmem, size = 0x200, scoped, tag = 'scoped memory for tpu_custom_call.1']
  %s0 = inlined_call_operand.vmem [shape: f32[128,20], index: 0, kind: input, shape index: {}]
  %s1 = inlined_call_operand.vmem [shape: f32[64,20], index: 1, kind: input, shape index: {}]
  %s2 = inlined_call_operand.vmem [shape: f32[64,1], index: 2, kind: input, shape index: {}]
  %s3 = inlined_call_operand.vmem [shape: f32[64,64], index: 3, kind: input, shape index: {}]
  %s4 = inlined_call_operand.vmem [shape: f32[64,1], index: 4, kind: input, shape index: {}]
  %s5 = inlined_call_operand.vmem [shape: f32[64,64], index: 5, kind: input, shape index: {}]
  %s6 = inlined_call_operand.vmem [shape: f32[64,1], index: 6, kind: input, shape index: {}]
  %s7 = inlined_call_operand.vmem [shape: f32[64,1], index: 7, kind: input, shape index: {}]
  %s8 = inlined_call_operand.<no memory space> [shape: f32[1,1], index: 8, kind: input, shape index: {}]
  %s9 = inlined_call_operand.hbm [shape: f32[1,128], index: 9, kind: output, shape index: {}]
  %s10 = sld [smem:[#allocation0]]
  $region46: #{tpu_custom_call.1} parent=0
    _
  %s12 = ssub.s32 1, %s10
  %s13 = scalar_select 0, %s12, %s10
  %v14 = vstv %s8
  %15 = vst [vmem:[#allocation2] sm:$0x1] %v14
  $region1: #{tpu_custom_call.1} parent=0
    #allocation3 [shape = 'u8[512]{0}', space=vmem, size = 0x400, scoped, tag = 'output window, operand 0, single buffered']
    #allocation4 [shape = 's32[1]{0}', space=sflag, size = 0x4, scoped, tag = 'scoped memory for tpu_custom_call.1']
    %16 = vsyncpa [#allocation4], 0
    // Predicated region
    $region2: #{tpu_custom_call.1} parent=1 // pred_check
      _
    $region3: #{tpu_custom_call.1} parent=1 // pred_check_branch
      %18 = sbr.rel (0) target = $region5
    $region4: #{tpu_custom_call.1} parent=1 // pred_region
      _
    $region5: #{tpu_custom_call.1} parent=1 // pred_fallthru
      _
    // Predicated region
    $region6: #{tpu_custom_call.1} parent=1 // pred_check
      _
    $region7: #{tpu_custom_call.1} parent=1 // pred_check_branch
      %20 = sbr.rel (0) target = $region9
    $region8: #{tpu_custom_call.1} parent=1 // pred_region
      _
    $region9: #{tpu_custom_call.1} parent=1 // pred_fallthru
      _
    // Predicated region
    $region10: #{tpu_custom_call.1} parent=1 // pred_check
      _
    $region11: #{tpu_custom_call.1} parent=1 // pred_check_branch
      %22 = sbr.rel (0) target = $region13
    $region12: #{tpu_custom_call.1} parent=1 // pred_region
      _
    $region13: #{tpu_custom_call.1} parent=1 // pred_fallthru
      _
    // Predicated region
    $region14: #{tpu_custom_call.1} parent=1 // pred_check
      _
    $region15: #{tpu_custom_call.1} parent=1 // pred_check_branch
      %24 = sbr.rel (0) target = $region17
    $region16: #{tpu_custom_call.1} parent=1 // pred_region
      _
    $region17: #{tpu_custom_call.1} parent=1 // pred_fallthru
      _
    // Predicated region
    $region18: #{tpu_custom_call.1} parent=1 // pred_check
      _
    $region19: #{tpu_custom_call.1} parent=1 // pred_check_branch
      %26 = sbr.rel (0) target = $region21
    $region20: #{tpu_custom_call.1} parent=1 // pred_region
      _
    $region21: #{tpu_custom_call.1} parent=1 // pred_fallthru
      _
    // Predicated region
    $region22: #{tpu_custom_call.1} parent=1 // pred_check
      _
    $region23: #{tpu_custom_call.1} parent=1 // pred_check_branch
      %28 = sbr.rel (0) target = $region25
    $region24: #{tpu_custom_call.1} parent=1 // pred_region
      _
    $region25: #{tpu_custom_call.1} parent=1 // pred_fallthru
      _
    // Predicated region
    $region26: #{tpu_custom_call.1} parent=1 // pred_check
      _
    $region27: #{tpu_custom_call.1} parent=1 // pred_check_branch
      %30 = sbr.rel (0) target = $region29
    $region28: #{tpu_custom_call.1} parent=1 // pred_region
      _
    $region29: #{tpu_custom_call.1} parent=1 // pred_fallthru
      _
    // Predicated region
    $region30: #{tpu_custom_call.1} parent=1 // pred_check
      _
    $region31: #{tpu_custom_call.1} parent=1 // pred_check_branch
      %32 = sbr.rel (0) target = $region33
    $region32: #{tpu_custom_call.1} parent=1 // pred_region
      _
    $region33: #{tpu_custom_call.1} parent=1 // pred_fallthru
      _
    // Predicated region
    $region34: #{tpu_custom_call.1} parent=1 // pred_check
      _
    $region35: #{tpu_custom_call.1} parent=1 // pred_check_branch
      %34 = sbr.rel (0) target = $region37
    $region36: #{tpu_custom_call.1} parent=1 // pred_region
      _
    $region37: #{tpu_custom_call.1} parent=1 // pred_fallthru
      _
    %v35 = vld [vmem:[%s0] sm:$0xff]
    %v36 = vld [vmem:[%s0 + $0x8] sm:$0xff]
    %v37 = vld [vmem:[%s0 + $0x10] sm:$0xff]
    %v38 = vld [vmem:[%s0 + $0x18] sm:$0xff]
    %v39 = vld [vmem:[%s0 + $0x20] sm:$0xff]
    %v40 = vld [vmem:[%s0 + $0x28] sm:$0xff]
    %v41 = vld [vmem:[%s0 + $0x30] sm:$0xff]
    %v42 = vld [vmem:[%s0 + $0x38] sm:$0xff]
    %v43 = vld [vmem:[%s0 + $0x40] sm:$0xff]
    %v44 = vld [vmem:[%s0 + $0x48] sm:$0xff]
    %v45 = vld [vmem:[%s0 + $0x50] sm:$0xff]
    %v46 = vld [vmem:[%s0 + $0x58] sm:$0xff]
    %v47 = vld [vmem:[%s0 + $0x60] sm:$0xff]
    %v48 = vld [vmem:[%s0 + $0x68] sm:$0xff]
    %v49 = vld [vmem:[%s0 + $0x70] sm:$0xff]
    %v50 = vld [vmem:[%s0 + $0x78] sm:$0xff]
    %v51 = vld [vmem:[%s1] sm:$0xff]
    %v52 = vld [vmem:[%s1 + $0x8] sm:$0xff]
    %v53 = vld [vmem:[%s1 + $0x10] sm:$0xff]
    %v54 = vld [vmem:[%s1 + $0x18] sm:$0xff]
    %v55 = vld [vmem:[%s1 + $0x20] sm:$0xff]
    %v56 = vld [vmem:[%s1 + $0x28] sm:$0xff]
    %v57 = vld [vmem:[%s1 + $0x30] sm:$0xff]
    %v58 = vld [vmem:[%s1 + $0x38] sm:$0xff]
    %v59 = vld [vmem:[%s2] sm:$0xff]
    %v60 = vld [vmem:[%s2 + $0x8] sm:$0xff]
    %v61 = vld [vmem:[%s2 + $0x10] sm:$0xff]
    %v62 = vld [vmem:[%s2 + $0x18] sm:$0xff]
    %v63 = vld [vmem:[%s2 + $0x20] sm:$0xff]
    %v64 = vld [vmem:[%s2 + $0x28] sm:$0xff]
    %v65 = vld [vmem:[%s2 + $0x30] sm:$0xff]
    %v66 = vld [vmem:[%s2 + $0x38] sm:$0xff]
    %68 = vset.pattern.permute.xlu0 0
    %69 = vperm.xlu0 %68, %v59
    %v70 = vpop.permute.xlu0 %69
    %73 = vset.pattern.permute.xlu0 0
    %74 = vperm.xlu0 %73, %v60
    %v75 = vpop.permute.xlu0 %74
    %78 = vset.pattern.permute.xlu0 0
    %79 = vperm.xlu0 %78, %v61
    %v80 = vpop.permute.xlu0 %79
    %83 = vset.pattern.permute.xlu0 0
    %84 = vperm.xlu0 %83, %v62
    %v85 = vpop.permute.xlu0 %84
    %88 = vset.pattern.permute.xlu0 0
    %89 = vperm.xlu0 %88, %v63
    %v90 = vpop.permute.xlu0 %89
    %93 = vset.pattern.permute.xlu0 0
    %94 = vperm.xlu0 %93, %v64
    %v95 = vpop.permute.xlu0 %94
    %98 = vset.pattern.permute.xlu0 0
    %99 = vperm.xlu0 %98, %v65
    %v100 = vpop.permute.xlu0 %99
    %103 = vset.pattern.permute.xlu0 0
    %104 = vperm.xlu0 %103, %v66
    %v105 = vpop.permute.xlu0 %104
    %vm107 = vcmask 162816
    %v109 = vsel %vm107, %v51, 0
    %v112 = vsel %vm107, %v52, 0
    %v115 = vsel %vm107, %v53, 0
    %v118 = vsel %vm107, %v54, 0
    %v121 = vsel %vm107, %v55, 0
    %v124 = vsel %vm107, %v56, 0
    %v127 = vsel %vm107, %v57, 0
    %v130 = vsel %vm107, %v58, 0
    %v133 = vsel %vm107, %v35, 0
    %v136 = vsel %vm107, %v36, 0
    %v139 = vsel %vm107, %v37, 0
    %v142 = vsel %vm107, %v38, 0
    %v145 = vsel %vm107, %v39, 0
    %v148 = vsel %vm107, %v40, 0
    %v151 = vsel %vm107, %v41, 0
    %v154 = vsel %vm107, %v42, 0
    %v157 = vsel %vm107, %v43, 0
    %v160 = vsel %vm107, %v44, 0
    %v163 = vsel %vm107, %v45, 0
    %v166 = vsel %vm107, %v46, 0
    %v169 = vsel %vm107, %v47, 0
    %v172 = vsel %vm107, %v48, 0
    %v175 = vsel %vm107, %v49, 0
    %v178 = vsel %vm107, %v50, 0
    %180 = vmatprep.subr.mxu0 0.0
    %181 = vmatpush1.xpose.msra.mxu0 %v133
    %182 = vmatprep.subr.mxu0 0.0
    %183 = vmatpush1.xpose.msra.mxu0 %v136
    %184 = vmatprep.subr.mxu0 0.0
    %185 = vmatpush1.xpose.msra.mxu0 %v139
    %186 = vmatprep.subr.mxu0 0.0
    %187 = vmatpush1.xpose.msra.mxu0 %v142
    %188 = vmatprep.subr.mxu0 0.0
    %189 = vmatpush1.xpose.msra.mxu0 %v145
    %190 = vmatprep.subr.mxu0 0.0
    %191 = vmatpush1.xpose.msra.mxu0 %v148
    %192 = vmatprep.subr.mxu0 0.0
    %193 = vmatpush1.xpose.msra.mxu0 %v151
    %194 = vmatprep.subr.mxu0 0.0
    %195 = vmatpush1.xpose.msra.mxu0 %v154
    %196 = vmatprep.subr.mxu0 0.0
    %197 = vmatpush1.xpose.msra.mxu0 %v157
    %198 = vmatprep.subr.mxu0 0.0
    %199 = vmatpush1.xpose.msra.mxu0 %v160
    %200 = vmatprep.subr.mxu0 0.0
    %201 = vmatpush1.xpose.msra.mxu0 %v163
    %202 = vmatprep.subr.mxu0 0.0
    %203 = vmatpush1.xpose.msra.mxu0 %v166
    %204 = vmatprep.subr.mxu0 0.0
    %205 = vmatpush1.xpose.msra.mxu0 %v169
    %206 = vmatprep.subr.mxu0 0.0
    %207 = vmatpush1.xpose.msra.mxu0 %v172
    %208 = vmatprep.subr.mxu0 0.0
    %209 = vmatpush1.xpose.msra.mxu0 %v175
    %210 = vmatprep.subr.mxu0 0.0
    %211 = vmatpush1.xpose.msra.mxu0 %v178
    %212 = vmatprep.subr.mxu0 0.0
    %213 = vmatpush1.xpose.msra.mxu0 0.0
    %214 = vmatprep.subr.mxu0 0.0
    %215 = vmatpush1.xpose.msra.mxu0 0.0
    %216 = vmatprep.subr.mxu0 0.0
    %217 = vmatpush1.xpose.msra.mxu0 0.0
    %218 = vmatprep.subr.mxu0 0.0
    %219 = vmatpush1.xpose.msra.mxu0 0.0
    %220 = vmatprep.subr.mxu0 0.0
    %221 = vmatpush1.xpose.msra.mxu0 0.0
    %222 = vmatprep.subr.mxu0 0.0
    %223 = vmatpush1.xpose.msra.mxu0 0.0
    %224 = vmatprep.subr.mxu0 0.0
    %225 = vmatpush1.xpose.msra.mxu0 0.0
    %226 = vmatprep.subr.mxu0 0.0
    %227 = vmatpush1.xpose.msra.mxu0 0.0
    %228 = vmatprep.subr.mxu0 0.0
    %229 = vmatpush1.xpose.msra.mxu0 0.0
    %230 = vmatprep.subr.mxu0 0.0
    %231 = vmatpush1.xpose.msra.mxu0 0.0
    %232 = vmatprep.subr.mxu0 0.0
    %233 = vmatpush1.xpose.msra.mxu0 0.0
    %234 = vmatprep.subr.mxu0 0.0
    %235 = vmatpush1.xpose.msra.mxu0 0.0
    %236 = vmatprep.subr.mxu0 0.0
    %237 = vmatpush1.xpose.msra.mxu0 0.0
    %238 = vmatprep.subr.mxu0 0.0
    %239 = vmatpush1.xpose.msra.mxu0 0.0
    %240 = vmatprep.subr.mxu0 0.0
    %241 = vmatpush1.xpose.msra.mxu0 0.0
    %242 = vmatprep.subr.mxu0 0.0
    %243 = vmatpush1.xpose.msra.mxu0 0.0
    %244 = vmatprep.mubr.f32.mxu0 0.0
    %245 = vmatmul.mubr.f32.gmra.mrb[0].mxu0 %v109
    %v246 = vpop.f32.mrb[0].mxu0
    %v247 = vadd.f32 %v70, %v246
    %v248 = vpop.f32.mrb[0].mxu0
    %249 = vmatprep.mubr.f32.mxu0 0.0
    %250 = vmatmul.mubr.f32.gmra.mrb[0].mxu0 %v112
    %v251 = vpop.f32.mrb[0].mxu0
    %v252 = vadd.f32 %v75, %v251
    %v253 = vpop.f32.mrb[0].mxu0
    %254 = vmatprep.mubr.f32.mxu0 0.0
    %255 = vmatmul.mubr.f32.gmra.mrb[0].mxu0 %v115
    %v256 = vpop.f32.mrb[0].mxu0
    %v257 = vadd.f32 %v80, %v256
    %v258 = vpop.f32.mrb[0].mxu0
    %259 = vmatprep.mubr.f32.mxu0 0.0
    %260 = vmatmul.mubr.f32.gmra.mrb[0].mxu0 %v118
    %v261 = vpop.f32.mrb[0].mxu0
    %v262 = vadd.f32 %v85, %v261
    %v263 = vpop.f32.mrb[0].mxu0
    %264 = vmatprep.mubr.f32.mxu0 0.0
    %265 = vmatmul.mubr.f32.gmra.mrb[0].mxu0 %v121
    %v266 = vpop.f32.mrb[0].mxu0
    %v267 = vadd.f32 %v90, %v266
    %v268 = vpop.f32.mrb[0].mxu0
    %269 = vmatprep.mubr.f32.mxu0 0.0
    %270 = vmatmul.mubr.f32.gmra.mrb[0].mxu0 %v124
    %v271 = vpop.f32.mrb[0].mxu0
    %v272 = vadd.f32 %v95, %v271
    %v273 = vpop.f32.mrb[0].mxu0
    %274 = vmatprep.mubr.f32.mxu0 0.0
    %275 = vmatmul.mubr.f32.gmra.mrb[0].mxu0 %v127
    %v276 = vpop.f32.mrb[0].mxu0
    %v277 = vadd.f32 %v100, %v276
    %v278 = vpop.f32.mrb[0].mxu0
    %279 = vmatprep.mubr.f32.mxu0 0.0
    %280 = vmatmul.mubr.f32.gmra.mrb[0].mxu0 %v130
    %v281 = vpop.f32.mrb[0].mxu0
    %v282 = vadd.f32 %v105, %v281
    %v283 = vpop.f32.mrb[0].mxu0
    %284 = vdwg.mxu0
    %v285 = vtanh.pop %v247
    %v286 = vtanh.pop %v252
    %v287 = vtanh.pop %v257
    %v288 = vtanh.pop %v262
    %v289 = vtanh.pop %v267
    %v290 = vtanh.pop %v272
    %v291 = vtanh.pop %v277
    %v292 = vtanh.pop %v282
    %v293 = vld [vmem:[%s3] sm:$0xff]
    %v294 = vld [vmem:[%s3 + $0x8] sm:$0xff]
    %v295 = vld [vmem:[%s3 + $0x10] sm:$0xff]
    %v296 = vld [vmem:[%s3 + $0x18] sm:$0xff]
    %v297 = vld [vmem:[%s3 + $0x20] sm:$0xff]
    %v298 = vld [vmem:[%s3 + $0x28] sm:$0xff]
    %v299 = vld [vmem:[%s3 + $0x30] sm:$0xff]
    %v300 = vld [vmem:[%s3 + $0x38] sm:$0xff]
    %v301 = vld [vmem:[%s4] sm:$0xff]
    %v302 = vld [vmem:[%s4 + $0x8] sm:$0xff]
    %v303 = vld [vmem:[%s4 + $0x10] sm:$0xff]
    %v304 = vld [vmem:[%s4 + $0x18] sm:$0xff]
    %v305 = vld [vmem:[%s4 + $0x20] sm:$0xff]
    %v306 = vld [vmem:[%s4 + $0x28] sm:$0xff]
    %v307 = vld [vmem:[%s4 + $0x30] sm:$0xff]
    %v308 = vld [vmem:[%s4 + $0x38] sm:$0xff]
    %310 = vset.pattern.permute.xlu0 0
    %311 = vperm.xlu0 %310, %v301
    %v312 = vpop.permute.xlu0 %311
    %315 = vset.pattern.permute.xlu0 0
    %316 = vperm.xlu0 %315, %v302
    %v317 = vpop.permute.xlu0 %316
    %320 = vset.pattern.permute.xlu0 0
    %321 = vperm.xlu0 %320, %v303
    %v322 = vpop.permute.xlu0 %321
    %325 = vset.pattern.permute.xlu0 0
    %326 = vperm.xlu0 %325, %v304
    %v327 = vpop.permute.xlu0 %326
    %330 = vset.pattern.permute.xlu0 0
    %331 = vperm.xlu0 %330, %v305
    %v332 = vpop.permute.xlu0 %331
    %335 = vset.pattern.permute.xlu0 0
    %336 = vperm.xlu0 %335, %v306
    %v337 = vpop.permute.xlu0 %336
    %340 = vset.pattern.permute.xlu0 0
    %341 = vperm.xlu0 %340, %v307
    %v342 = vpop.permute.xlu0 %341
    %345 = vset.pattern.permute.xlu0 0
    %346 = vperm.xlu0 %345, %v308
    %v347 = vpop.permute.xlu0 %346
    %vm349 = vcmask 523264
    %v351 = vsel %vm349, %v293, 0
    %v354 = vsel %vm349, %v294, 0
    %v357 = vsel %vm349, %v295, 0
    %v360 = vsel %vm349, %v296, 0
    %v363 = vsel %vm349, %v297, 0
    %v366 = vsel %vm349, %v298, 0
    %v369 = vsel %vm349, %v299, 0
    %v372 = vsel %vm349, %v300, 0
    %374 = vmatprep.subr.mxu0 0.0
    %375 = vmatpush1.msra.mxu0 %v285
    %376 = vmatprep.subr.mxu0 0.0
    %377 = vmatpush1.msra.mxu0 %v286
    %378 = vmatprep.subr.mxu0 0.0
    %379 = vmatpush1.msra.mxu0 %v287
    %380 = vmatprep.subr.mxu0 0.0
    %381 = vmatpush1.msra.mxu0 %v288
    %382 = vmatprep.subr.mxu0 0.0
    %383 = vmatpush1.msra.mxu0 %v289
    %384 = vmatprep.subr.mxu0 0.0
    %385 = vmatpush1.msra.mxu0 %v290
    %386 = vmatprep.subr.mxu0 0.0
    %387 = vmatpush1.msra.mxu0 %v291
    %388 = vmatprep.subr.mxu0 0.0
    %389 = vmatpush1.msra.mxu0 %v292
    %390 = vmatprep.subr.mxu0 0.0
    %391 = vmatpush1.msra.mxu0 0.0
    %392 = vmatprep.subr.mxu0 0.0
    %393 = vmatpush1.msra.mxu0 0.0
    %394 = vmatprep.subr.mxu0 0.0
    %395 = vmatpush1.msra.mxu0 0.0
    %396 = vmatprep.subr.mxu0 0.0
    %397 = vmatpush1.msra.mxu0 0.0
    %398 = vmatprep.subr.mxu0 0.0
    %399 = vmatpush1.msra.mxu0 0.0
    %400 = vmatprep.subr.mxu0 0.0
    %401 = vmatpush1.msra.mxu0 0.0
    %402 = vmatprep.subr.mxu0 0.0
    %403 = vmatpush1.msra.mxu0 0.0
    %404 = vmatprep.subr.mxu0 0.0
    %405 = vmatpush1.msra.mxu0 0.0
    %406 = vmatprep.subr.mxu0 0.0
    %407 = vmatpush1.msra.mxu0 0.0
    %408 = vmatprep.subr.mxu0 0.0
    %409 = vmatpush1.msra.mxu0 0.0
    %410 = vmatprep.subr.mxu0 0.0
    %411 = vmatpush1.msra.mxu0 0.0
    %412 = vmatprep.subr.mxu0 0.0
    %413 = vmatpush1.msra.mxu0 0.0
    %414 = vmatprep.subr.mxu0 0.0
    %415 = vmatpush1.msra.mxu0 0.0
    %416 = vmatprep.subr.mxu0 0.0
    %417 = vmatpush1.msra.mxu0 0.0
    %418 = vmatprep.subr.mxu0 0.0
    %419 = vmatpush1.msra.mxu0 0.0
    %420 = vmatprep.subr.mxu0 0.0
    %421 = vmatpush1.msra.mxu0 0.0
    %422 = vmatprep.subr.mxu0 0.0
    %423 = vmatpush1.msra.mxu0 0.0
    %424 = vmatprep.subr.mxu0 0.0
    %425 = vmatpush1.msra.mxu0 0.0
    %426 = vmatprep.subr.mxu0 0.0
    %427 = vmatpush1.msra.mxu0 0.0
    %428 = vmatprep.subr.mxu0 0.0
    %429 = vmatpush1.msra.mxu0 0.0
    %430 = vmatprep.subr.mxu0 0.0
    %431 = vmatpush1.msra.mxu0 0.0
    %432 = vmatprep.subr.mxu0 0.0
    %433 = vmatpush1.msra.mxu0 0.0
    %434 = vmatprep.subr.mxu0 0.0
    %435 = vmatpush1.msra.mxu0 0.0
    %436 = vmatprep.subr.mxu0 0.0
    %437 = vmatpush1.msra.mxu0 0.0
    %438 = vmatprep.mubr.f32.mxu0 0.0
    %439 = vmatmul.mubr.f32.gmra.mrb[0].mxu0 %v351
    %v440 = vpop.f32.mrb[0].mxu0
    %v441 = vadd.f32 %v312, %v440
    %v442 = vpop.f32.mrb[0].mxu0
    %443 = vmatprep.mubr.f32.mxu0 0.0
    %444 = vmatmul.mubr.f32.gmra.mrb[0].mxu0 %v354
    %v445 = vpop.f32.mrb[0].mxu0
    %v446 = vadd.f32 %v317, %v445
    %v447 = vpop.f32.mrb[0].mxu0
    %448 = vmatprep.mubr.f32.mxu0 0.0
    %449 = vmatmul.mubr.f32.gmra.mrb[0].mxu0 %v357
    %v450 = vpop.f32.mrb[0].mxu0
    %v451 = vadd.f32 %v322, %v450
    %v452 = vpop.f32.mrb[0].mxu0
    %453 = vmatprep.mubr.f32.mxu0 0.0
    %454 = vmatmul.mubr.f32.gmra.mrb[0].mxu0 %v360
    %v455 = vpop.f32.mrb[0].mxu0
    %v456 = vadd.f32 %v327, %v455
    %v457 = vpop.f32.mrb[0].mxu0
    %458 = vmatprep.mubr.f32.mxu0 0.0
    %459 = vmatmul.mubr.f32.gmra.mrb[0].mxu0 %v363
    %v460 = vpop.f32.mrb[0].mxu0
    %v461 = vadd.f32 %v332, %v460
    %v462 = vpop.f32.mrb[0].mxu0
    %463 = vmatprep.mubr.f32.mxu0 0.0
    %464 = vmatmul.mubr.f32.gmra.mrb[0].mxu0 %v366
    %v465 = vpop.f32.mrb[0].mxu0
    %v466 = vadd.f32 %v337, %v465
    %v467 = vpop.f32.mrb[0].mxu0
    %468 = vmatprep.mubr.f32.mxu0 0.0
    %469 = vmatmul.mubr.f32.gmra.mrb[0].mxu0 %v369
    %v470 = vpop.f32.mrb[0].mxu0
    %v471 = vadd.f32 %v342, %v470
    %v472 = vpop.f32.mrb[0].mxu0
    %473 = vmatprep.mubr.f32.mxu0 0.0
    %474 = vmatmul.mubr.f32.gmra.mrb[0].mxu0 %v372
    %v475 = vpop.f32.mrb[0].mxu0
    %v476 = vadd.f32 %v347, %v475
    %v477 = vpop.f32.mrb[0].mxu0
    %478 = vdwg.mxu0
    %v479 = vtanh.pop %v441
    %v480 = vtanh.pop %v446
    %v481 = vtanh.pop %v451
    %v482 = vtanh.pop %v456
    %v483 = vtanh.pop %v461
    %v484 = vtanh.pop %v466
    %v485 = vtanh.pop %v471
    %v486 = vtanh.pop %v476
    %v487 = vld [vmem:[%s5] sm:$0xff]
    %v488 = vld [vmem:[%s5 + $0x8] sm:$0xff]
    %v489 = vld [vmem:[%s5 + $0x10] sm:$0xff]
    %v490 = vld [vmem:[%s5 + $0x18] sm:$0xff]
    %v491 = vld [vmem:[%s5 + $0x20] sm:$0xff]
    %v492 = vld [vmem:[%s5 + $0x28] sm:$0xff]
    %v493 = vld [vmem:[%s5 + $0x30] sm:$0xff]
    %v494 = vld [vmem:[%s5 + $0x38] sm:$0xff]
    %v495 = vld [vmem:[%s6] sm:$0xff]
    %v496 = vld [vmem:[%s6 + $0x8] sm:$0xff]
    %v497 = vld [vmem:[%s6 + $0x10] sm:$0xff]
    %v498 = vld [vmem:[%s6 + $0x18] sm:$0xff]
    %v499 = vld [vmem:[%s6 + $0x20] sm:$0xff]
    %v500 = vld [vmem:[%s6 + $0x28] sm:$0xff]
    %v501 = vld [vmem:[%s6 + $0x30] sm:$0xff]
    %v502 = vld [vmem:[%s6 + $0x38] sm:$0xff]
    %504 = vset.pattern.permute.xlu0 0
    %505 = vperm.xlu0 %504, %v495
    %v506 = vpop.permute.xlu0 %505
    %509 = vset.pattern.permute.xlu0 0
    %510 = vperm.xlu0 %509, %v496
    %v511 = vpop.permute.xlu0 %510
    %514 = vset.pattern.permute.xlu0 0
    %515 = vperm.xlu0 %514, %v497
    %v516 = vpop.permute.xlu0 %515
    %519 = vset.pattern.permute.xlu0 0
    %520 = vperm.xlu0 %519, %v498
    %v521 = vpop.permute.xlu0 %520
    %524 = vset.pattern.permute.xlu0 0
    %525 = vperm.xlu0 %524, %v499
    %v526 = vpop.permute.xlu0 %525
    %529 = vset.pattern.permute.xlu0 0
    %530 = vperm.xlu0 %529, %v500
    %v531 = vpop.permute.xlu0 %530
    %534 = vset.pattern.permute.xlu0 0
    %535 = vperm.xlu0 %534, %v501
    %v536 = vpop.permute.xlu0 %535
    %539 = vset.pattern.permute.xlu0 0
    %540 = vperm.xlu0 %539, %v502
    %v541 = vpop.permute.xlu0 %540
    %v544 = vsel %vm349, %v487, 0
    %v547 = vsel %vm349, %v488, 0
    %v550 = vsel %vm349, %v489, 0
    %v553 = vsel %vm349, %v490, 0
    %v556 = vsel %vm349, %v491, 0
    %v559 = vsel %vm349, %v492, 0
    %v562 = vsel %vm349, %v493, 0
    %v565 = vsel %vm349, %v494, 0
    %567 = vmatprep.subr.mxu0 0.0
    %568 = vmatpush1.msra.mxu0 %v479
    %569 = vmatprep.subr.mxu0 0.0
    %570 = vmatpush1.msra.mxu0 %v480
    %571 = vmatprep.subr.mxu0 0.0
    %572 = vmatpush1.msra.mxu0 %v481
    %573 = vmatprep.subr.mxu0 0.0
    %574 = vmatpush1.msra.mxu0 %v482
    %575 = vmatprep.subr.mxu0 0.0
    %576 = vmatpush1.msra.mxu0 %v483
    %577 = vmatprep.subr.mxu0 0.0
    %578 = vmatpush1.msra.mxu0 %v484
    %579 = vmatprep.subr.mxu0 0.0
    %580 = vmatpush1.msra.mxu0 %v485
    %581 = vmatprep.subr.mxu0 0.0
    %582 = vmatpush1.msra.mxu0 %v486
    %583 = vmatprep.subr.mxu0 0.0
    %584 = vmatpush1.msra.mxu0 0.0
    %585 = vmatprep.subr.mxu0 0.0
    %586 = vmatpush1.msra.mxu0 0.0
    %587 = vmatprep.subr.mxu0 0.0
    %588 = vmatpush1.msra.mxu0 0.0
    %589 = vmatprep.subr.mxu0 0.0
    %590 = vmatpush1.msra.mxu0 0.0
    %591 = vmatprep.subr.mxu0 0.0
    %592 = vmatpush1.msra.mxu0 0.0
    %593 = vmatprep.subr.mxu0 0.0
    %594 = vmatpush1.msra.mxu0 0.0
    %595 = vmatprep.subr.mxu0 0.0
    %596 = vmatpush1.msra.mxu0 0.0
    %597 = vmatprep.subr.mxu0 0.0
    %598 = vmatpush1.msra.mxu0 0.0
    %599 = vmatprep.subr.mxu0 0.0
    %600 = vmatpush1.msra.mxu0 0.0
    %601 = vmatprep.subr.mxu0 0.0
    %602 = vmatpush1.msra.mxu0 0.0
    %603 = vmatprep.subr.mxu0 0.0
    %604 = vmatpush1.msra.mxu0 0.0
    %605 = vmatprep.subr.mxu0 0.0
    %606 = vmatpush1.msra.mxu0 0.0
    %607 = vmatprep.subr.mxu0 0.0
    %608 = vmatpush1.msra.mxu0 0.0
    %609 = vmatprep.subr.mxu0 0.0
    %610 = vmatpush1.msra.mxu0 0.0
    %611 = vmatprep.subr.mxu0 0.0
    %612 = vmatpush1.msra.mxu0 0.0
    %613 = vmatprep.subr.mxu0 0.0
    %614 = vmatpush1.msra.mxu0 0.0
    %615 = vmatprep.subr.mxu0 0.0
    %616 = vmatpush1.msra.mxu0 0.0
    %617 = vmatprep.subr.mxu0 0.0
    %618 = vmatpush1.msra.mxu0 0.0
    %619 = vmatprep.subr.mxu0 0.0
    %620 = vmatpush1.msra.mxu0 0.0
    %621 = vmatprep.subr.mxu0 0.0
    %622 = vmatpush1.msra.mxu0 0.0
    %623 = vmatprep.subr.mxu0 0.0
    %624 = vmatpush1.msra.mxu0 0.0
    %625 = vmatprep.subr.mxu0 0.0
    %626 = vmatpush1.msra.mxu0 0.0
    %627 = vmatprep.subr.mxu0 0.0
    %628 = vmatpush1.msra.mxu0 0.0
    %629 = vmatprep.subr.mxu0 0.0
    %630 = vmatpush1.msra.mxu0 0.0
    %631 = vmatprep.mubr.f32.mxu0 0.0
    %632 = vmatmul.mubr.f32.gmra.mrb[0].mxu0 %v544
    %v633 = vpop.f32.mrb[0].mxu0
    %v634 = vadd.f32 %v506, %v633
    %v635 = vpop.f32.mrb[0].mxu0
    %636 = vmatprep.mubr.f32.mxu0 0.0
    %637 = vmatmul.mubr.f32.gmra.mrb[0].mxu0 %v547
    %v638 = vpop.f32.mrb[0].mxu0
    %v639 = vadd.f32 %v511, %v638
    %v640 = vpop.f32.mrb[0].mxu0
    %641 = vmatprep.mubr.f32.mxu0 0.0
    %642 = vmatmul.mubr.f32.gmra.mrb[0].mxu0 %v550
    %v643 = vpop.f32.mrb[0].mxu0
    %v644 = vadd.f32 %v516, %v643
    %v645 = vpop.f32.mrb[0].mxu0
    %646 = vmatprep.mubr.f32.mxu0 0.0
    %647 = vmatmul.mubr.f32.gmra.mrb[0].mxu0 %v553
    %v648 = vpop.f32.mrb[0].mxu0
    %v649 = vadd.f32 %v521, %v648
    %v650 = vpop.f32.mrb[0].mxu0
    %651 = vmatprep.mubr.f32.mxu0 0.0
    %652 = vmatmul.mubr.f32.gmra.mrb[0].mxu0 %v556
    %v653 = vpop.f32.mrb[0].mxu0
    %v654 = vadd.f32 %v526, %v653
    %v655 = vpop.f32.mrb[0].mxu0
    %656 = vmatprep.mubr.f32.mxu0 0.0
    %657 = vmatmul.mubr.f32.gmra.mrb[0].mxu0 %v559
    %v658 = vpop.f32.mrb[0].mxu0
    %v659 = vadd.f32 %v531, %v658
    %v660 = vpop.f32.mrb[0].mxu0
    %661 = vmatprep.mubr.f32.mxu0 0.0
    %662 = vmatmul.mubr.f32.gmra.mrb[0].mxu0 %v562
    %v663 = vpop.f32.mrb[0].mxu0
    %v664 = vadd.f32 %v536, %v663
    %v665 = vpop.f32.mrb[0].mxu0
    %666 = vmatprep.mubr.f32.mxu0 0.0
    %667 = vmatmul.mubr.f32.gmra.mrb[0].mxu0 %v565
    %v668 = vpop.f32.mrb[0].mxu0
    %v669 = vadd.f32 %v541, %v668
    %v670 = vpop.f32.mrb[0].mxu0
    %671 = vdwg.mxu0
    %v672 = vtanh.pop %v634
    %v673 = vtanh.pop %v639
    %v674 = vtanh.pop %v644
    %v675 = vtanh.pop %v649
    %v676 = vtanh.pop %v654
    %v677 = vtanh.pop %v659
    %v678 = vtanh.pop %v664
    %v679 = vtanh.pop %v669
    %v680 = vld [vmem:[%s7] sm:$0xff]
    %v681 = vld [vmem:[%s7 + $0x8] sm:$0xff]
    %v682 = vld [vmem:[%s7 + $0x10] sm:$0xff]
    %v683 = vld [vmem:[%s7 + $0x18] sm:$0xff]
    %v684 = vld [vmem:[%s7 + $0x20] sm:$0xff]
    %v685 = vld [vmem:[%s7 + $0x28] sm:$0xff]
    %v686 = vld [vmem:[%s7 + $0x30] sm:$0xff]
    %v687 = vld [vmem:[%s7 + $0x38] sm:$0xff]
    %689 = vset.pattern.permute.xlu0 0
    %690 = vperm.xlu0 %689, %v680
    %v691 = vpop.permute.xlu0 %690
    %694 = vset.pattern.permute.xlu0 0
    %695 = vperm.xlu0 %694, %v681
    %v696 = vpop.permute.xlu0 %695
    %699 = vset.pattern.permute.xlu0 0
    %700 = vperm.xlu0 %699, %v682
    %v701 = vpop.permute.xlu0 %700
    %704 = vset.pattern.permute.xlu0 0
    %705 = vperm.xlu0 %704, %v683
    %v706 = vpop.permute.xlu0 %705
    %709 = vset.pattern.permute.xlu0 0
    %710 = vperm.xlu0 %709, %v684
    %v711 = vpop.permute.xlu0 %710
    %714 = vset.pattern.permute.xlu0 0
    %715 = vperm.xlu0 %714, %v685
    %v716 = vpop.permute.xlu0 %715
    %719 = vset.pattern.permute.xlu0 0
    %720 = vperm.xlu0 %719, %v686
    %v721 = vpop.permute.xlu0 %720
    %724 = vset.pattern.permute.xlu0 0
    %725 = vperm.xlu0 %724, %v687
    %v726 = vpop.permute.xlu0 %725
    %v728 = vmul.f32 %v672, %v691
    %v729 = vmul.f32 %v673, %v696
    %v730 = vmul.f32 %v674, %v701
    %v731 = vmul.f32 %v675, %v706
    %v732 = vmul.f32 %v676, %v711
    %v733 = vmul.f32 %v677, %v716
    %v734 = vmul.f32 %v678, %v721
    %v735 = vmul.f32 %v679, %v726
    %v736 = vadd.f32 %v728, %v729
    %v737 = vadd.f32 %v736, %v730
    %v738 = vadd.f32 %v737, %v731
    %v739 = vadd.f32 %v738, %v732
    %v740 = vadd.f32 %v739, %v733
    %v741 = vadd.f32 %v740, %v734
    %v742 = vadd.f32 %v741, %v735
    %v743 = vrot.slane %v742, 4
    %v744 = vadd.f32 %v742, %v743
    %v745 = vrot.slane %v744, 2
    %v746 = vadd.f32 %v744, %v745
    %v747 = vrot.slane %v746, 1
    %v748 = vadd.f32 %v746, %v747
    %v749 = vld [vmem:[#allocation2] sm:$0x1]
    %751 = vset.pattern.permute.xlu0 0
    %752 = vperm.xlu0 %751, %v749
    %v753 = vpop.permute.xlu0 %752
    %v755 = vlaneseq
    %v756 = vshrl.u32 %v755, 7
    %v757 = vsub.s32 0, %v756
    %v758 = vrot.slane %v753, %v757
    %v759 = vadd.f32 %v748, %v758
    %v760 = vmax.f32 %v759, -10.0
    %v761 = vmin.f32 %v760, 10.0
    %762 = vst [vmem:[#allocation3] sm:$0x1] %v761
    // Predicated region
    $region38: #{tpu_custom_call.1} parent=1 // pred_check
      _
    $region39: #{tpu_custom_call.1} parent=1 // pred_check_branch
      %764 = sbr.rel (0) target = $region41
    $region40: #{tpu_custom_call.1} parent=1 // pred_region
      %s766 = ssub.s32 16, 16
      %767 = vsyncadd [#allocation4], %s766
      %s769 = sshll.u32 [#allocation3], 4
      %s770 = int_to_ptr.vmem [resolvable:$true] %s769
      %772 = dma.vmem_to_hbm [thread:$0]  %s770, 16, %s9, [#allocation4]
    $region41: #{tpu_custom_call.1} parent=1 // pred_fallthru
      _
    // Predicated region
    $region42: #{tpu_custom_call.1} parent=1 // pred_check
      _
    $region43: #{tpu_custom_call.1} parent=1 // pred_check_branch
      %774 = sbr.rel (0) target = $region45
    $region44: #{tpu_custom_call.1} parent=1 // pred_region
      %775 = dma.done [#allocation4], 16
    $region45: #{tpu_custom_call.1} parent=1 // pred_fallthru
      _
    %776 = vsyncpa [#allocation4], 1

</llo_original>
